<compile_context>
chip_gen: v7x
topology: tpu7x:2x2x1
jax: 0.10.0
libtpu: 0.0.40
codegen_flags: <defaults>
</compile_context>

<pallas_src>
import jax
import jax.numpy as jnp
from jax.experimental import pallas as pl
from jax.experimental.pallas import tpu as pltpu


def _round_up(x, m):
    return (x + m - 1) // m * m


def _make_gather_kernel(tokens_per_step):
    T = tokens_per_step

    def kernel(ids_ref, tbl_hbm, out_ref, sem):
        # ids_ref: SMEM int32[n_pad] token ids (scalar-prefetched).
        # tbl_hbm: raw HBM ref to the full (vocab, gather_dim) table.
        # out_ref: (T, gather_dim) VMEM output block for this grid step.
        # sem:     ()-shaped DMA-completion semaphore shared by all T copies.
        base = pl.multiple_of(pl.program_id(0) * T, T)

        # Issue all T row gathers back-to-back; every copy lands directly in
        # the pipelined output block.  All SMEM id reads happen before any
        # wait (avoids the sst->sld forwarding break around .wait()).
        for t in range(T):  # static unroll
            row = ids_ref[base + t]  # dynamic scalar read from SMEM
            pltpu.make_async_copy(
                tbl_hbm.at[pl.ds(row, 1), :],   # (1, dim) HBM row of the table
                out_ref.at[pl.ds(t, 1), :],     # (1, dim) slot of the out block
                sem,
            ).start()

        # One aggregate wait: DMA semaphores count bytes, and the T row copies
        # sum to exactly one full (T, dim) block.
        pltpu.make_async_copy(out_ref, out_ref, sem).wait()

    return kernel


def embedding_lookup(table, ids, *, block_tokens=512):
    """table: [vocab, dim] float array; ids: integer array of any shape.

    Returns ids.shape + (dim,) with out[..., :] = table[ids[...], :], matching
    torch.nn.Embedding forward semantics (ids clamped in-range instead of
    raising on out-of-range indices).
    """
    vocab, dim = table.shape
    out_dtype = table.dtype

    # bf16 tables: pack pairs of bf16 into uint32 words so each single-row
    # gather DMA stays 32-bit aligned; unpacked again after the kernel.
    packed = (table.dtype == jnp.bfloat16) and (dim % 2 == 0)
    if packed:
        gather_tbl = jax.lax.bitcast_convert_type(
            table.reshape(vocab, dim // 2, 2), jnp.uint32)
        gather_dim = dim // 2
    else:
        gather_tbl = table
        gather_dim = dim
    gather_dtype = gather_tbl.dtype

    flat_ids = ids.reshape(-1).astype(jnp.int32)
    n = flat_ids.shape[0]
    # Keep the data-dependent DMA in bounds (torch raises; we clamp).
    flat_ids = jnp.clip(flat_ids, 0, vocab - 1)
    n8 = _round_up(n, 8)

    itemsize = jnp.dtype(gather_dtype).itemsize
    row_bytes = gather_dim * itemsize

    # Tokens per grid step: multiple of 8 (sublane); cap so the double-buffered
    # (T, gather_dim) output block uses at most ~40 MiB (fits v7x's 64 MiB/TC
    # with headroom, and trivially fits v5e/v6e's 128 MiB).
    t_vmem_cap = max(8, ((40 << 20) // (2 * row_bytes)) // 8 * 8)
    T = max(8, min(block_tokens, t_vmem_cap, n8))
    # Keep >= 2 grid steps when there is enough work so v7x's two TensorCores
    # both issue gather descriptors (no effect on single-core v5e/v6e).
    if n8 >= 16:
        T = min(T, _round_up(pl.cdiv(n8, 2), 8))

    n_pad = _round_up(n, T)
    if n_pad != n:
        flat_ids = jnp.concatenate(
            [flat_ids, jnp.zeros((n_pad - n,), dtype=jnp.int32)]
        )
    # TODO(synk): for very long id vectors (100K+ tokens) switch from whole-
    # array scalar prefetch to an SMEM-blocked (T,) id input so only one
    # block of ids lives in SMEM per step.

    # Only the double-buffered (T, gather_dim) output block lives in VMEM.
    # Cap the scoped limit at 48 MiB so it is legal on v7x's 64 MiB/TC.
    vmem_limit = int(min(48 << 20, max(32 << 20, 2 * T * row_bytes + (8 << 20))))

    out = pl.pallas_call(
        _make_gather_kernel(T),
        out_shape=jax.ShapeDtypeStruct((n_pad, gather_dim), gather_dtype),
        grid_spec=pltpu.PrefetchScalarGridSpec(
            num_scalar_prefetch=1,                 # flat_ids -> SMEM
            grid=(n_pad // T,),                    # T tokens per grid step
            in_specs=[
                pl.BlockSpec(memory_space=pl.ANY)  # table stays in HBM; manual DMA
            ],
            out_specs=pl.BlockSpec((T, gather_dim), lambda i, ids_ref: (i, 0)),
            scratch_shapes=[pltpu.SemaphoreType.DMA(())],   # ()-shaped DMA sem
        ),
        compiler_params=pltpu.CompilerParams(
            dimension_semantics=("parallel",),     # shard token axis across TCs (v7x)
            vmem_limit_bytes=vmem_limit,
        ),
    )(flat_ids, gather_tbl)

    out = out[:n]
    if packed:
        out = jax.lax.bitcast_convert_type(out, jnp.bfloat16).reshape(n, dim)
    return out.reshape(ids.shape + (dim,)).astype(out_dtype)


if __name__ == "__main__":
    # Real module: nn.Embedding(num_embeddings=32000, embedding_dim=4096).
    # The kernel is shape-agnostic; demo uses small, consistent sizes.
    VOCAB, DIM = 1024, 512
    BATCH, SEQ = 2, 8

    key = jax.random.PRNGKey(0)
    k_tbl, k_ids, k_ids2 = jax.random.split(key, 3)
    table = jax.random.normal(k_tbl, (VOCAB, DIM), dtype=jnp.float32)

    # Case 1: fp32 table (matches the PyTorch module's default weight dtype).
    x = jax.random.randint(k_ids, (BATCH, SEQ), 0, VOCAB, dtype=jnp.int32)
    y = jax.block_until_ready(embedding_lookup(table, x))
    ref = jnp.take(table, x, axis=0)
    assert y.shape == (BATCH, SEQ, DIM), y.shape
    assert y.dtype == table.dtype
    assert bool(jnp.array_equal(y, ref))

    # Case 2: ragged token count (exercises the pad/slice path).
    x2 = jax.random.randint(k_ids2, (3, 5), 0, VOCAB, dtype=jnp.int32)
    y2 = jax.block_until_ready(embedding_lookup(table, x2))
    ref2 = jnp.take(table, x2, axis=0)
    assert y2.shape == (3, 5, DIM), y2.shape
    assert bool(jnp.array_equal(y2, ref2))

    # Case 3: bf16 table (exercises the uint32-packed gather path; halves the
    # HBM read bytes when serving the table in bfloat16).
    table_bf16 = table.astype(jnp.bfloat16)
    y3 = jax.block_until_ready(embedding_lookup(table_bf16, x))
    ref3 = jnp.take(table_bf16, x, axis=0)
    assert y3.dtype == jnp.bfloat16
    assert bool(jnp.array_equal(y3, ref3))

    print("KERNEL_OK")
</pallas_src>

<mosaic_0001>
module attributes {stable_mosaic.version = 11 : i64} {
  func.func @kernel(%arg0: i32, %arg1: memref<16xi32, #tpu.memory_space<smem>>, %arg2: memref<1024x512xf32, #tpu.memory_space<any>>, %arg3: memref<8x512xf32, #tpu.memory_space<vmem>>, %arg4: memref<!tpu.dma_semaphore, #tpu.memory_space<semaphore_mem>>) attributes {dimension_semantics = [#tpu.dimension_semantics<parallel>], iteration_bounds = array<i64: 2>, scalar_prefetch = 1 : i64, scratch_operands = 1 : i64, tpu.core_type = #tpu.core_type<tc>, window_params = [{}, {transform_indices = @transform_1, window_bounds = array<i64: 8, 512>}]} {
    %c8_i32 = arith.constant 8 : i32
    %0 = arith.muli %arg0, %c8_i32 : i32
    %1 = tpu.assume_multiple %0, 8 : i32
    %c0_i32 = arith.constant 0 : i32
    %2 = arith.addi %1, %c0_i32 : i32
    %3 = arith.index_cast %2 : i32 to index
    %4 = memref.load %arg1[%3] : memref<16xi32, #tpu.memory_space<smem>>
    %c0_i32_0 = arith.constant 0 : i32
    %5 = tpu.memref_slice %arg2[%4, %c0_i32_0] : memref<1024x512xf32, #tpu.memory_space<any>> -> memref<1x512xf32, #tpu.memory_space<any>>
    %c0_i32_1 = arith.constant 0 : i32
    %c0_i32_2 = arith.constant 0 : i32
    %6 = tpu.memref_slice %arg3[%c0_i32_1, %c0_i32_2] : memref<8x512xf32, #tpu.memory_space<vmem>> -> memref<1x512xf32, #tpu.memory_space<vmem>>
    tpu.enqueue_dma source(%5 : memref<1x512xf32, #tpu.memory_space<any>>) target(%6 : memref<1x512xf32, #tpu.memory_space<vmem>>) target_semaphore(%arg4 : memref<!tpu.dma_semaphore, #tpu.memory_space<semaphore_mem>>)
    %c1_i32 = arith.constant 1 : i32
    %7 = arith.addi %1, %c1_i32 : i32
    %8 = arith.index_cast %7 : i32 to index
    %9 = memref.load %arg1[%8] : memref<16xi32, #tpu.memory_space<smem>>
    %c0_i32_3 = arith.constant 0 : i32
    %10 = tpu.memref_slice %arg2[%9, %c0_i32_3] : memref<1024x512xf32, #tpu.memory_space<any>> -> memref<1x512xf32, #tpu.memory_space<any>>
    %c1_i32_4 = arith.constant 1 : i32
    %c0_i32_5 = arith.constant 0 : i32
    %11 = tpu.memref_slice %arg3[%c1_i32_4, %c0_i32_5] : memref<8x512xf32, #tpu.memory_space<vmem>> -> memref<1x512xf32, #tpu.memory_space<vmem>>
    tpu.enqueue_dma source(%10 : memref<1x512xf32, #tpu.memory_space<any>>) target(%11 : memref<1x512xf32, #tpu.memory_space<vmem>>) target_semaphore(%arg4 : memref<!tpu.dma_semaphore, #tpu.memory_space<semaphore_mem>>)
    %c2_i32 = arith.constant 2 : i32
    %12 = arith.addi %1, %c2_i32 : i32
    %13 = arith.index_cast %12 : i32 to index
    %14 = memref.load %arg1[%13] : memref<16xi32, #tpu.memory_space<smem>>
    %c0_i32_6 = arith.constant 0 : i32
    %15 = tpu.memref_slice %arg2[%14, %c0_i32_6] : memref<1024x512xf32, #tpu.memory_space<any>> -> memref<1x512xf32, #tpu.memory_space<any>>
    %c2_i32_7 = arith.constant 2 : i32
    %c0_i32_8 = arith.constant 0 : i32
    %16 = tpu.memref_slice %arg3[%c2_i32_7, %c0_i32_8] : memref<8x512xf32, #tpu.memory_space<vmem>> -> memref<1x512xf32, #tpu.memory_space<vmem>>
    tpu.enqueue_dma source(%15 : memref<1x512xf32, #tpu.memory_space<any>>) target(%16 : memref<1x512xf32, #tpu.memory_space<vmem>>) target_semaphore(%arg4 : memref<!tpu.dma_semaphore, #tpu.memory_space<semaphore_mem>>)
    %c3_i32 = arith.constant 3 : i32
    %17 = arith.addi %1, %c3_i32 : i32
    %18 = arith.index_cast %17 : i32 to index
    %19 = memref.load %arg1[%18] : memref<16xi32, #tpu.memory_space<smem>>
    %c0_i32_9 = arith.constant 0 : i32
    %20 = tpu.memref_slice %arg2[%19, %c0_i32_9] : memref<1024x512xf32, #tpu.memory_space<any>> -> memref<1x512xf32, #tpu.memory_space<any>>
    %c3_i32_10 = arith.constant 3 : i32
    %c0_i32_11 = arith.constant 0 : i32
    %21 = tpu.memref_slice %arg3[%c3_i32_10, %c0_i32_11] : memref<8x512xf32, #tpu.memory_space<vmem>> -> memref<1x512xf32, #tpu.memory_space<vmem>>
    tpu.enqueue_dma source(%20 : memref<1x512xf32, #tpu.memory_space<any>>) target(%21 : memref<1x512xf32, #tpu.memory_space<vmem>>) target_semaphore(%arg4 : memref<!tpu.dma_semaphore, #tpu.memory_space<semaphore_mem>>)
    %c4_i32 = arith.constant 4 : i32
    %22 = arith.addi %1, %c4_i32 : i32
    %23 = arith.index_cast %22 : i32 to index
    %24 = memref.load %arg1[%23] : memref<16xi32, #tpu.memory_space<smem>>
    %c0_i32_12 = arith.constant 0 : i32
    %25 = tpu.memref_slice %arg2[%24, %c0_i32_12] : memref<1024x512xf32, #tpu.memory_space<any>> -> memref<1x512xf32, #tpu.memory_space<any>>
    %c4_i32_13 = arith.constant 4 : i32
    %c0_i32_14 = arith.constant 0 : i32
    %26 = tpu.memref_slice %arg3[%c4_i32_13, %c0_i32_14] : memref<8x512xf32, #tpu.memory_space<vmem>> -> memref<1x512xf32, #tpu.memory_space<vmem>>
    tpu.enqueue_dma source(%25 : memref<1x512xf32, #tpu.memory_space<any>>) target(%26 : memref<1x512xf32, #tpu.memory_space<vmem>>) target_semaphore(%arg4 : memref<!tpu.dma_semaphore, #tpu.memory_space<semaphore_mem>>)
    %c5_i32 = arith.constant 5 : i32
    %27 = arith.addi %1, %c5_i32 : i32
    %28 = arith.index_cast %27 : i32 to index
    %29 = memref.load %arg1[%28] : memref<16xi32, #tpu.memory_space<smem>>
    %c0_i32_15 = arith.constant 0 : i32
    %30 = tpu.memref_slice %arg2[%29, %c0_i32_15] : memref<1024x512xf32, #tpu.memory_space<any>> -> memref<1x512xf32, #tpu.memory_space<any>>
    %c5_i32_16 = arith.constant 5 : i32
    %c0_i32_17 = arith.constant 0 : i32
    %31 = tpu.memref_slice %arg3[%c5_i32_16, %c0_i32_17] : memref<8x512xf32, #tpu.memory_space<vmem>> -> memref<1x512xf32, #tpu.memory_space<vmem>>
    tpu.enqueue_dma source(%30 : memref<1x512xf32, #tpu.memory_space<any>>) target(%31 : memref<1x512xf32, #tpu.memory_space<vmem>>) target_semaphore(%arg4 : memref<!tpu.dma_semaphore, #tpu.memory_space<semaphore_mem>>)
    %c6_i32 = arith.constant 6 : i32
    %32 = arith.addi %1, %c6_i32 : i32
    %33 = arith.index_cast %32 : i32 to index
    %34 = memref.load %arg1[%33] : memref<16xi32, #tpu.memory_space<smem>>
    %c0_i32_18 = arith.constant 0 : i32
    %35 = tpu.memref_slice %arg2[%34, %c0_i32_18] : memref<1024x512xf32, #tpu.memory_space<any>> -> memref<1x512xf32, #tpu.memory_space<any>>
    %c6_i32_19 = arith.constant 6 : i32
    %c0_i32_20 = arith.constant 0 : i32
    %36 = tpu.memref_slice %arg3[%c6_i32_19, %c0_i32_20] : memref<8x512xf32, #tpu.memory_space<vmem>> -> memref<1x512xf32, #tpu.memory_space<vmem>>
    tpu.enqueue_dma source(%35 : memref<1x512xf32, #tpu.memory_space<any>>) target(%36 : memref<1x512xf32, #tpu.memory_space<vmem>>) target_semaphore(%arg4 : memref<!tpu.dma_semaphore, #tpu.memory_space<semaphore_mem>>)
    %c7_i32 = arith.constant 7 : i32
    %37 = arith.addi %1, %c7_i32 : i32
    %38 = arith.index_cast %37 : i32 to index
    %39 = memref.load %arg1[%38] : memref<16xi32, #tpu.memory_space<smem>>
    %c0_i32_21 = arith.constant 0 : i32
    %40 = tpu.memref_slice %arg2[%39, %c0_i32_21] : memref<1024x512xf32, #tpu.memory_space<any>> -> memref<1x512xf32, #tpu.memory_space<any>>
    %c7_i32_22 = arith.constant 7 : i32
    %c0_i32_23 = arith.constant 0 : i32
    %41 = tpu.memref_slice %arg3[%c7_i32_22, %c0_i32_23] : memref<8x512xf32, #tpu.memory_space<vmem>> -> memref<1x512xf32, #tpu.memory_space<vmem>>
    tpu.enqueue_dma source(%40 : memref<1x512xf32, #tpu.memory_space<any>>) target(%41 : memref<1x512xf32, #tpu.memory_space<vmem>>) target_semaphore(%arg4 : memref<!tpu.dma_semaphore, #tpu.memory_space<semaphore_mem>>)
    tpu.wait_dma2 semaphore(%arg4 : memref<!tpu.dma_semaphore, #tpu.memory_space<semaphore_mem>>) src(%arg3 : memref<8x512xf32, #tpu.memory_space<vmem>>) dst(%arg3 : memref<8x512xf32, #tpu.memory_space<vmem>>)
    return
  }
  func.func @transform_1(%arg0: i32, %arg1: memref<16xi32, #tpu.memory_space<smem>>) -> (i32, i32) {
    %c0_i32 = arith.constant 0 : i32
    %c0_i32_0 = arith.constant 0 : i32
    return %arg0, %c0_i32 : i32, i32
  }
}

</mosaic_0001>

<llo_original>
// kernel: tpu_custom_call.1
$region0: #{tpu_custom_call.1}
  #allocation0 [shape = 'u32[]', space=smem, size = 0x4, offset = 0x4, fixed_abs, tag = 'smem constant byte address 0x4 - core index']
  #allocation1 [shape = 'u32[144,128]{1,0:T(1,128)}', space=vmem, size = 0x12000, scoped, tag = 'internal scratch']
  #allocation2 [shape = 's32[1]{0}', space=sflag, size = 0x4, scoped, tag = 'scratch operand']
  #allocation3 [shape = 's32[1]{0}', space=sflag, size = 0x4, scoped, tag = 'scoped memory for tpu_custom_call.1']
  #allocation4 [shape = 'u8[512]{0}', space=smem, size = 0x200, scoped, tag = 'prefetched SMEM operand 0']
  #allocation7 [shape = 's32[]', space=sflag, size = 0x4, offset = 0, fixed_abs, tag = 'sflag constant byte address 0x0 - dummy sync flag']
  #allocation8 [shape = 's32[]', space=sflag, size = 0x4, offset = 0, fixed_abs, tag = 'sflag constant byte address 0x0 - dummy sync flag']
  #allocation9 [shape = 's32[]', space=sflag, size = 0x4, offset = 0, fixed_abs, tag = 'sflag constant byte address 0x0 - dummy sync flag']
  #allocation10 [shape = 's32[]', space=sflag, size = 0x4, offset = 0, fixed_abs, tag = 'sflag constant byte address 0x0 - dummy sync flag']
  #allocation11 [shape = 's32[]', space=sflag, size = 0x4, offset = 0, fixed_abs, tag = 'sflag constant byte address 0x0 - dummy sync flag']
  #allocation12 [shape = 's32[]', space=sflag, size = 0x4, offset = 0, fixed_abs, tag = 'sflag constant byte address 0x0 - dummy sync flag']
  #allocation13 [shape = 's32[]', space=sflag, size = 0x4, offset = 0, fixed_abs, tag = 'sflag constant byte address 0x0 - dummy sync flag']
  #allocation14 [shape = 's32[]', space=sflag, size = 0x4, offset = 0, fixed_abs, tag = 'sflag constant byte address 0x0 - dummy sync flag']
  %s0 = inlined_call_operand.hbm [shape: s32[16], index: 0, kind: input, shape index: {}]
  %s1 = inlined_call_operand.hbm [shape: f32[1024,512], index: 1, kind: input, shape index: {}]
  %s2 = inlined_call_operand.hbm [shape: f32[16,512], index: 2, kind: output, shape index: {}]
  %s3 = sld [smem:[#allocation0]]
  $region25: #{tpu_custom_call.1} parent=0
    _
  %s5 = ssub.s32 1, %s3
  %s6 = scalar_select 0, %s5, %s3
  %8 = dma.hbm_to_smem %s0, 16, [#allocation4], [#allocation3]
  %9 = dma.done [#allocation3], 16
  %10 = sfence
  $region1: #{tpu_custom_call.1} parent=0
    #allocation5 [shape = 'u8[32768]{0}', space=vmem, size = 0x8000, scoped, tag = 'output window, operand 0']
    #allocation6 [shape = 's32[2]{0}', space=sflag, size = 0x8, scoped, tag = 'scoped memory for tpu_custom_call.1']
    %11 = vsyncpa [#allocation6], 0
    %s12 = scalar_lea.sflag [#allocation6], 1
    %13 = vsyncpa %s12, 0
    loop: start=0, step=1, limit=3
    $region2: #{tpu_custom_call.1} parent=1 // loop_pre_header
      _
    $region3: #{tpu_custom_call.1} parent=1 // loop_header
      %s15 = sphi 0, %s19
      %p16 = scmp.ge.s32.totalorder %s15, 3
      %s24 = sphi 0, %s26
      %s27 = sphi 0, %s24
      %s37 = sphi 0, %s27
    $region4: #{tpu_custom_call.1} parent=1 // loop_header_branch
      %18 = sbr.rel (%p16) target = $region8
    $region5: #{tpu_custom_call.1} parent=1 // loop_body
      %s20 = ssub.s32 %s15, 1
      %s21 = sadd.s32 %s15, 1
      %s22 = ssub.s32 %s15, %s21
      %p23 = scmp.eq.s32.totalorder %s22, 0
      %s25 = sadd.s32 %s24, 1
      %s26 = scalar_select %p23, %s24, %s25
      %p28 = pneg %p23
      %p29 = scmp.eq.s32.totalorder %s15, 1
      %p30 = por %p28, %p29
      %p31 = scmp.ne.s32.totalorder %s24, %s27
      %p32 = scmp.eq.s32.totalorder %s15, 0
      %p33 = por %p31, %p32
      %p34 = scmp.ne.s32.totalorder %s24, %s27
      %p35 = scmp.eq.s32.totalorder %s20, 1
      %p36 = por %p34, %p35
      %p38 = scmp.ne.s32.totalorder %s27, %s37
      %p39 = scmp.eq.s32.totalorder %s20, 0
      %p40 = por %p38, %p39
      %p41 = scmp.lt.s32.totalorder %s15, 2
      // Predicated region
      $region9: #{tpu_custom_call.1} parent=5 // pred_check
        %p42 = pneg %p41
      $region10: #{tpu_custom_call.1} parent=5 // pred_check_branch
        %44 = sbr.rel (%p42) target = $region12
      $region11: #{tpu_custom_call.1} parent=5 // pred_region
        %p45 = pneg %p33
        %p46 = pneg %p30
        %s47 = sand.u32 %s24, 1
        %s48 = scalar_lea.sflag [#allocation6], %s47
        %s49 = sand.u32 %s24, 1
        %s50 = smul.addr %s49, 32
        %s51 = scalar_lea.vmem [#allocation5], %s50
        %s52 = smul.u32 %s15, 8
        %s53 = sld [smem:[#allocation4 + %s52]]
        %s54 = sshrl.u32 %s53, 3
        %s55 = sand.u32 %s53, 7
        %s56 = smul.u32 %s54, 32
        %s57 = sadd.s32 %s55, %s56
        %s58 = smul.addr %s57, 16
        %s59 = scalar_lea.hbm %s1, %s58
        %s61 = sshll.u32 %s51, 4
        %s62 = int_to_ptr.vmem [resolvable:$true] %s61
        %64 = dma.hbm_to_vmem [thread:$0]  %s59, 64, %s62, [#allocation2], 128, 128, 1
        %s65 = sadd.s32 %s52, 1
        %s66 = sld [smem:[#allocation4 + %s65]]
        %s67 = sshrl.u32 %s66, 3
        %s68 = sand.u32 %s66, 7
        %s69 = smul.u32 %s67, 32
        %s70 = sadd.s32 %s68, %s69
        %s71 = smul.addr %s70, 16
        %s72 = scalar_lea.hbm %s1, %s71
        %s73 = scalar_lea.vmem %s51, 1 [#allocation5]
        %s75 = sshll.u32 %s73, 4
        %s76 = int_to_ptr.vmem [resolvable:$true] %s75
        %78 = dma.hbm_to_vmem [thread:$0]  %s72, 64, %s76, [#allocation2], 128, 128, 1
        %s79 = sadd.s32 %s52, 2
        %s80 = sld [smem:[#allocation4 + %s79]]
        %s81 = sshrl.u32 %s80, 3
        %s82 = sand.u32 %s80, 7
        %s83 = smul.u32 %s81, 32
        %s84 = sadd.s32 %s82, %s83
        %s85 = smul.addr %s84, 16
        %s86 = scalar_lea.hbm %s1, %s85
        %s87 = scalar_lea.vmem %s51, 2 [#allocation5]
        %s89 = sshll.u32 %s87, 4
        %s90 = int_to_ptr.vmem [resolvable:$true] %s89
        %92 = dma.hbm_to_vmem [thread:$0]  %s86, 64, %s90, [#allocation2], 128, 128, 1
        %s93 = sadd.s32 %s52, 3
        %s94 = sld [smem:[#allocation4 + %s93]]
        %s95 = sshrl.u32 %s94, 3
        %s96 = sand.u32 %s94, 7
        %s97 = smul.u32 %s95, 32
        %s98 = sadd.s32 %s96, %s97
        %s99 = smul.addr %s98, 16
        %s100 = scalar_lea.hbm %s1, %s99
        %s101 = scalar_lea.vmem %s51, 3 [#allocation5]
        %s103 = sshll.u32 %s101, 4
        %s104 = int_to_ptr.vmem [resolvable:$true] %s103
        %106 = dma.hbm_to_vmem [thread:$0]  %s100, 64, %s104, [#allocation2], 128, 128, 1
        %s107 = sadd.s32 %s52, 4
        %s108 = sld [smem:[#allocation4 + %s107]]
        %s109 = sshrl.u32 %s108, 3
        %s110 = sand.u32 %s108, 7
        %s111 = smul.u32 %s109, 32
        %s112 = sadd.s32 %s110, %s111
        %s113 = smul.addr %s112, 16
        %s114 = scalar_lea.hbm %s1, %s113
        %s115 = scalar_lea.vmem %s51, 4 [#allocation5]
        %s117 = sshll.u32 %s115, 4
        %s118 = int_to_ptr.vmem [resolvable:$true] %s117
        %120 = dma.hbm_to_vmem [thread:$0]  %s114, 64, %s118, [#allocation2], 128, 128, 1
        %s121 = sadd.s32 %s52, 5
        %s122 = sld [smem:[#allocation4 + %s121]]
        %s123 = sshrl.u32 %s122, 3
        %s124 = sand.u32 %s122, 7
        %s125 = smul.u32 %s123, 32
        %s126 = sadd.s32 %s124, %s125
        %s127 = smul.addr %s126, 16
        %s128 = scalar_lea.hbm %s1, %s127
        %s129 = scalar_lea.vmem %s51, 5 [#allocation5]
        %s131 = sshll.u32 %s129, 4
        %s132 = int_to_ptr.vmem [resolvable:$true] %s131
        %134 = dma.hbm_to_vmem [thread:$0]  %s128, 64, %s132, [#allocation2], 128, 128, 1
        %s135 = sadd.s32 %s52, 6
        %s136 = sld [smem:[#allocation4 + %s135]]
        %s137 = sshrl.u32 %s136, 3
        %s138 = sand.u32 %s136, 7
        %s139 = smul.u32 %s137, 32
        %s140 = sadd.s32 %s138, %s139
        %s141 = smul.addr %s140, 16
        %s142 = scalar_lea.hbm %s1, %s141
        %s143 = scalar_lea.vmem %s51, 6 [#allocation5]
        %s145 = sshll.u32 %s143, 4
        %s146 = int_to_ptr.vmem [resolvable:$true] %s145
        %148 = dma.hbm_to_vmem [thread:$0]  %s142, 64, %s146, [#allocation2], 128, 128, 1
        %s149 = sadd.s32 %s52, 7
        %s150 = sld [smem:[#allocation4 + %s149]]
        %s151 = sshrl.u32 %s150, 3
        %s152 = sand.u32 %s150, 7
        %s153 = smul.u32 %s151, 32
        %s154 = sadd.s32 %s152, %s153
        %s155 = smul.addr %s154, 16
        %s156 = scalar_lea.hbm %s1, %s155
        %s157 = scalar_lea.vmem %s51, 7 [#allocation5]
        %s159 = sshll.u32 %s157, 4
        %s160 = int_to_ptr.vmem [resolvable:$true] %s159
        %162 = dma.hbm_to_vmem [thread:$0]  %s156, 64, %s160, [#allocation2], 128, 128, 1
        %s163 = smul.u32 8, 1
        %s164 = smul.u32 %s163, 4
        %s165 = sshll.u32 %s164, 4
        %166 = dma.done [#allocation2], %s165
        %s167 = sand.u32 %s24, 1
        %s168 = scalar_lea.sflag [#allocation6], %s167
        %s169 = sand.u32 %s24, 1
        %s170 = smul.addr %s169, 32
        %s171 = scalar_lea.vmem [#allocation5], %s170
        // Predicated region
        $region13: #{tpu_custom_call.1} parent=11 // pred_check
          %p172 = pneg %p30
        $region14: #{tpu_custom_call.1} parent=11 // pred_check_branch
          %174 = sbr.rel (%p172) target = $region16
        $region15: #{tpu_custom_call.1} parent=11 // pred_region
          %s176 = ssub.s32 512, 512
          %177 = vsyncadd %s168, %s176
          %s178 = smul.addr %s15, 4
          %s179 = smul.addr %s178, 128
          %s180 = scalar_lea.hbm %s2, %s179
          %s182 = sshll.u32 %s171, 4
          %s183 = int_to_ptr.vmem [resolvable:$true] %s182
          %185 = dma.vmem_to_hbm [thread:$0]  %s183, 512, %s180, %s168
        $region16: #{tpu_custom_call.1} parent=11 // pred_fallthru
          _
      $region12: #{tpu_custom_call.1} parent=5 // pred_fallthru
        _
      %p186 = scmp.le.s32.totalorder 1, %s15
      // Predicated region
      $region17: #{tpu_custom_call.1} parent=5 // pred_check
        %p187 = pneg %p186
      $region18: #{tpu_custom_call.1} parent=5 // pred_check_branch
        %189 = sbr.rel (%p187) target = $region20
      $region19: #{tpu_custom_call.1} parent=5 // pred_region
        %s190 = ssub.s32 %s15, 1
        // Predicated region
        $region21: #{tpu_custom_call.1} parent=19 // pred_check
          %p191 = pneg %p36
        $region22: #{tpu_custom_call.1} parent=19 // pred_check_branch
          %193 = sbr.rel (%p191) target = $region24
        $region23: #{tpu_custom_call.1} parent=19 // pred_region
          %s194 = sand.u32 %s27, 1
          %s195 = scalar_lea.sflag [#allocation6], %s194
          %s196 = sand.u32 %s27, 1
          %s197 = smul.addr %s196, 32
          %s198 = scalar_lea.vmem [#allocation5], %s197
          %199 = dma.done %s195, 512
        $region24: #{tpu_custom_call.1} parent=19 // pred_fallthru
          _
      $region20: #{tpu_custom_call.1} parent=5 // pred_fallthru
        _
    $region6: #{tpu_custom_call.1} parent=1 // loop_footer
      %s19 = sadd.s32 1, %s15
    $region7: #{tpu_custom_call.1} parent=1 // loop_footer_branch
      %14 = sbr.rel target = $region3
    $region8: #{tpu_custom_call.1} parent=1 // loop_exit
      _
    %200 = vsyncpa [#allocation6], 1
    %s201 = scalar_lea.sflag [#allocation6], 1
    %202 = vsyncpa %s201, 1
  %203 = vsyncmov [#allocation2]
  %s204 = vpop.sfrf %203
  %p205 = scmp.eq.s32.totalorder %s204, 0
  %p206 = pneg %p205
  %208 = shalt.err (%p206)

</llo_original>
